<compile_context>
chip_gen: v7x
topology: tpu7x:2x2x1
jax: 0.10.0
libtpu: 0.0.40
codegen_flags: <defaults>
</compile_context>

<pallas_src>
import functools

import jax
import jax.numpy as jnp
from jax import lax
from jax.experimental import pallas as pl
from jax.experimental.pallas import tpu as pltpu


def _round_up(n, m):
    return -(-n // m) * m


def _cat_emb_kernel(idx_ref, table_ref, bias_ref, out_ref, *, n_features):
    # idx_ref:   (TB, F) int32 — flat indices into the K = F*C_pad row space
    # table_ref: (K, N_pad) float32 — block-diagonal packed embedding tables
    # bias_ref:  (1, N_pad) float32 — flattened per-feature bias
    # out_ref:   (TB, N_pad) float32 — lane-dense output slab
    idx = idx_ref[...]                                           # (TB, F)
    tb = idx.shape[0]
    k = table_ref.shape[0]
    iota_k = lax.broadcasted_iota(jnp.int32, (tb, k), 1)         # (TB, K)

    # Multi-hot over the disjoint per-feature blocks (exactly one 1 per
    # feature block per row).  F is small and static -> F VPU compares/adds.
    one_hot = (iota_k == idx[:, 0:1]).astype(jnp.float32)
    for f in range(1, n_features):
        one_hot += (iota_k == idx[:, f:f + 1]).astype(jnp.float32)

    # Single fused MXU contraction replaces F tiny per-feature matmuls.
    out = jnp.dot(one_hot, table_ref[...], preferred_element_type=jnp.float32)
    out_ref[...] = out + bias_ref[...]                           # one dense store


def categorical_embeddings(x_idx, table, bias, *, batch_tile=512):
    """x_idx: (..., F) ints; table: (F, C_pad, D) f32; bias: (F, D) f32
    -> (..., F, D) float32."""
    *lead, F = x_idx.shape
    F_t, C_pad, D = table.shape
    assert F == F_t, "last input dim must equal number of categorical features"
    B = 1
    for s in lead:
        B *= s
    x2d = x_idx.reshape(B, F).astype(jnp.int32)

    K = F * C_pad
    N = F * D
    N_pad = _round_up(N, 128)  # lane-dense output width

    # Block-diagonal packed table: feature f occupies rows [f*C_pad, (f+1)*C_pad)
    # and cols [f*D, (f+1)*D).
    table_bd = jnp.zeros((K, N_pad), jnp.float32)
    for f in range(F):
        table_bd = table_bd.at[f * C_pad:(f + 1) * C_pad,
                               f * D:(f + 1) * D].set(table[f].astype(jnp.float32))

    bias_flat = jnp.zeros((1, N_pad), jnp.float32)
    bias_flat = bias_flat.at[0, :N].set(bias.reshape(-1).astype(jnp.float32))

    # Flatten indices into the block-diagonal row space.
    offsets = (jnp.arange(F, dtype=jnp.int32) * C_pad)[None, :]
    x_flat = x2d + offsets                                        # (B, F)

    # Large batch tiles; pad ragged tail instead of asserting divisibility.
    batch_tile = max(8, min(batch_tile, _round_up(B, 8)))
    batch_tile = _round_up(batch_tile, 8)
    B_pad = _round_up(B, batch_tile)
    if B_pad != B:
        x_flat = jnp.pad(x_flat, ((0, B_pad - B), (0, 0)))        # pad rows -> idx 0
    grid = (B_pad // batch_tile,)

    kernel = functools.partial(_cat_emb_kernel, n_features=F)

    out = pl.pallas_call(
        kernel,
        out_shape=jax.ShapeDtypeStruct((B_pad, N_pad), jnp.float32),
        grid_spec=pltpu.PrefetchScalarGridSpec(
            num_scalar_prefetch=0,
            grid=grid,
            in_specs=[
                pl.BlockSpec((batch_tile, F), lambda b: (b, 0)),   # streamed
                pl.BlockSpec((K, N_pad), lambda b: (0, 0)),        # resident
                pl.BlockSpec((1, N_pad), lambda b: (0, 0)),        # resident
            ],
            out_specs=pl.BlockSpec((batch_tile, N_pad), lambda b: (b, 0)),
        ),
        compiler_params=pltpu.CompilerParams(
            dimension_semantics=("parallel",),
        ),
    )(x_flat, table_bd, bias_flat)

    return out[:B, :N].reshape(*lead, F, D)


def init_params(key, cardinalities, d_embedding):
    """Deterministic init matching reset_parameters: U(-d^-0.5, d^-0.5)."""
    F = len(cardinalities)
    d_rsqrt = d_embedding ** -0.5
    c_pad = max(8, _round_up(max(cardinalities), 8))  # pad to multiple of 8
    keys = jax.random.split(key, F + 1)
    table = jnp.zeros((F, c_pad, d_embedding), jnp.float32)
    for f, card in enumerate(cardinalities):
        w = jax.random.uniform(keys[f], (card, d_embedding),
                               minval=-d_rsqrt, maxval=d_rsqrt,
                               dtype=jnp.float32)
        table = table.at[f, :card, :].set(w)
    bias = jax.random.uniform(keys[F], (F, d_embedding),
                              minval=-d_rsqrt, maxval=d_rsqrt,
                              dtype=jnp.float32)
    return table, bias


if __name__ == "__main__":
    cardinalities = [3, 5, 7, 4]
    d_embedding = 32
    batch_shape = (2, 4)          # x.ndim >= 2, last dim = n_features
    F = len(cardinalities)

    key = jax.random.PRNGKey(0)
    k_param, k_idx = jax.random.split(key)
    table, bias = init_params(k_param, cardinalities, d_embedding)

    # Random valid category indices per feature, shape (*batch_shape, F).
    idx_keys = jax.random.split(k_idx, F)
    idx_cols = [jax.random.randint(idx_keys[f], batch_shape, 0,
                                   cardinalities[f], jnp.int32)
                for f in range(F)]
    x_idx = jnp.stack(idx_cols, axis=-1)

    out = categorical_embeddings(x_idx, table, bias)
    out = jax.block_until_ready(out)

    # Pure-JAX reference: per-feature gather + bias.
    ref = jnp.stack([table[f][x_idx[..., f]] for f in range(F)], axis=-2) + bias

    assert out.shape == (*batch_shape, F, d_embedding)
    assert jnp.allclose(out, ref, atol=1e-5, rtol=1e-5)
    print("KERNEL_OK")
</pallas_src>

<mosaic_0001>
module attributes {stable_mosaic.version = 11 : i64} {
  func.func @_cat_emb_kernel(%arg0: i32, %arg1: memref<8x4xi32, #tpu.memory_space<vmem>>, %arg2: memref<32x128xf32, #tpu.memory_space<vmem>>, %arg3: memref<1x128xf32, #tpu.memory_space<vmem>>, %arg4: memref<8x128xf32, #tpu.memory_space<vmem>>) attributes {dimension_semantics = [#tpu.dimension_semantics<parallel>], iteration_bounds = array<i64: 1>, scalar_prefetch = 0 : i64, scratch_operands = 0 : i64, tpu.core_type = #tpu.core_type<tc>, window_params = [{transform_indices = @transform_0, window_bounds = array<i64: 8, 4>}, {pipeline_mode = #tpu.pipeline_mode<synchronous>, transform_indices = @transform_1, window_bounds = array<i64: 32, 128>}, {pipeline_mode = #tpu.pipeline_mode<synchronous>, transform_indices = @transform_2, window_bounds = array<i64: 1, 128>}, {transform_indices = @transform_3, window_bounds = array<i64: 8, 128>}]} {
    %c0 = arith.constant 0 : index
    %c0_0 = arith.constant 0 : index
    %0 = vector.load %arg1[%c0, %c0_0] : memref<8x4xi32, #tpu.memory_space<vmem>>, vector<8x4xi32>
    %1 = tpu.iota {dimensions = array<i32: 1>} : vector<8x32xi32>
    %2 = vector.extract_strided_slice %0 {offsets = [0, 0], sizes = [8, 1], strides = [1, 1]} : vector<8x4xi32> to vector<8x1xi32>
    %3 = vector.broadcast %2 : vector<8x1xi32> to vector<8x32xi32>
    %4 = arith.cmpi eq, %1, %3 : vector<8x32xi32>
    %5 = arith.extui %4 : vector<8x32xi1> to vector<8x32xi32>
    %6 = arith.sitofp %5 : vector<8x32xi32> to vector<8x32xf32>
    %7 = vector.extract_strided_slice %0 {offsets = [0, 1], sizes = [8, 1], strides = [1, 1]} : vector<8x4xi32> to vector<8x1xi32>
    %8 = vector.broadcast %7 : vector<8x1xi32> to vector<8x32xi32>
    %9 = arith.cmpi eq, %1, %8 : vector<8x32xi32>
    %10 = arith.extui %9 : vector<8x32xi1> to vector<8x32xi32>
    %11 = arith.sitofp %10 : vector<8x32xi32> to vector<8x32xf32>
    %12 = arith.addf %6, %11 : vector<8x32xf32>
    %13 = vector.extract_strided_slice %0 {offsets = [0, 2], sizes = [8, 1], strides = [1, 1]} : vector<8x4xi32> to vector<8x1xi32>
    %14 = vector.broadcast %13 : vector<8x1xi32> to vector<8x32xi32>
    %15 = arith.cmpi eq, %1, %14 : vector<8x32xi32>
    %16 = arith.extui %15 : vector<8x32xi1> to vector<8x32xi32>
    %17 = arith.sitofp %16 : vector<8x32xi32> to vector<8x32xf32>
    %18 = arith.addf %12, %17 : vector<8x32xf32>
    %19 = vector.extract_strided_slice %0 {offsets = [0, 3], sizes = [8, 1], strides = [1, 1]} : vector<8x4xi32> to vector<8x1xi32>
    %20 = vector.broadcast %19 : vector<8x1xi32> to vector<8x32xi32>
    %21 = arith.cmpi eq, %1, %20 : vector<8x32xi32>
    %22 = arith.extui %21 : vector<8x32xi1> to vector<8x32xi32>
    %23 = arith.sitofp %22 : vector<8x32xi32> to vector<8x32xf32>
    %24 = arith.addf %18, %23 : vector<8x32xf32>
    %c0_1 = arith.constant 0 : index
    %c0_2 = arith.constant 0 : index
    %25 = vector.load %arg2[%c0_1, %c0_2] : memref<32x128xf32, #tpu.memory_space<vmem>>, vector<32x128xf32>
    %cst = arith.constant dense<0.000000e+00> : vector<8x128xf32>
    %26 = tpu.matmul %24, %25, %cst {dimension_numbers = #tpu.dot_dimension_numbers<[1], [0], [0], [1], [0, 0, 1, 1], [], []>} : vector<8x32xf32>, vector<32x128xf32>, vector<8x128xf32> -> vector<8x128xf32>
    %c0_3 = arith.constant 0 : index
    %c0_4 = arith.constant 0 : index
    %27 = vector.load %arg3[%c0_3, %c0_4] : memref<1x128xf32, #tpu.memory_space<vmem>>, vector<1x128xf32>
    %28 = vector.broadcast %27 : vector<1x128xf32> to vector<8x128xf32>
    %29 = arith.addf %26, %28 : vector<8x128xf32>
    %c0_5 = arith.constant 0 : index
    %c0_6 = arith.constant 0 : index
    %30 = vector.load %arg4[%c0_5, %c0_6] : memref<8x128xf32, #tpu.memory_space<vmem>>, vector<8x128xf32>
    tpu.vector_store %arg4[%c0_5, %c0_6], %29 {strides = array<i32>} : memref<8x128xf32, #tpu.memory_space<vmem>>, vector<8x128xf32>,
    return
  }
  func.func @transform_0(%arg0: i32) -> (i32, i32) {
    %c0_i32 = arith.constant 0 : i32
    %c0_i32_0 = arith.constant 0 : i32
    return %arg0, %c0_i32 : i32, i32
  }
  func.func @transform_1(%arg0: i32) -> (i32, i32) {
    %c0_i32 = arith.constant 0 : i32
    %c0_i32_0 = arith.constant 0 : i32
    %c0_i32_1 = arith.constant 0 : i32
    return %c0_i32, %c0_i32_0 : i32, i32
  }
  func.func @transform_2(%arg0: i32) -> (i32, i32) {
    %c0_i32 = arith.constant 0 : i32
    %c0_i32_0 = arith.constant 0 : i32
    %c0_i32_1 = arith.constant 0 : i32
    return %c0_i32, %c0_i32_0 : i32, i32
  }
  func.func @transform_3(%arg0: i32) -> (i32, i32) {
    %c0_i32 = arith.constant 0 : i32
    %c0_i32_0 = arith.constant 0 : i32
    return %arg0, %c0_i32 : i32, i32
  }
}

</mosaic_0001>

<llo_original>
// kernel: tpu_custom_call.1
$region0: #{tpu_custom_call.1}
  #allocation0 [shape = 'u32[]', space=smem, size = 0x4, offset = 0x4, fixed_abs, tag = 'smem constant byte address 0x4 - core index']
  #allocation1 [shape = 'u32[144,128]{1,0:T(1,128)}', space=vmem, size = 0x12000, scoped, tag = 'internal scratch']
  %s0 = inlined_call_operand.vmem [shape: s32[8,4], index: 0, kind: input, shape index: {}]
  %s1 = inlined_call_operand.hbm [shape: f32[32,128], index: 1, kind: input, shape index: {}]
  %s2 = inlined_call_operand.vmem [shape: f32[1,128], index: 2, kind: input, shape index: {}]
  %s3 = inlined_call_operand.hbm [shape: f32[8,128], index: 3, kind: output, shape index: {}]
  %s4 = sld [smem:[#allocation0]]
  $region26: #{tpu_custom_call.1} parent=0
    _
  %s6 = ssub.s32 1, %s4
  %s7 = scalar_select 0, %s6, %s4
  $region1: #{tpu_custom_call.1} parent=0
    #allocation2 [shape = 'u8[16384]{0}', space=vmem, size = 0x4000, scoped, tag = 'input window, operand 1, single buffered']
    #allocation3 [shape = 's32[1]{0}', space=sflag, size = 0x4, scoped, tag = 'scoped memory for tpu_custom_call.1']
    #allocation4 [shape = 's32[1]{0}', space=sflag, size = 0x4, scoped, tag = 'scoped memory for tpu_custom_call.1']
    #allocation5 [shape = 'u8[4096]{0}', space=vmem, size = 0x1000, scoped, tag = 'output window, operand 0, single buffered']
    %8 = vsyncpa [#allocation3], 0
    %9 = vsyncpa [#allocation4], 0
    // Predicated region
    $region2: #{tpu_custom_call.1} parent=1 // pred_check
      _
    $region3: #{tpu_custom_call.1} parent=1 // pred_check_branch
      %11 = sbr.rel (0) target = $region5
    $region4: #{tpu_custom_call.1} parent=1 // pred_region
      _
    $region5: #{tpu_custom_call.1} parent=1 // pred_fallthru
      _
    // Predicated region
    $region6: #{tpu_custom_call.1} parent=1 // pred_check
      _
    $region7: #{tpu_custom_call.1} parent=1 // pred_check_branch
      %13 = sbr.rel (0) target = $region9
    $region8: #{tpu_custom_call.1} parent=1 // pred_region
      %s15 = ssub.s32 512, 512
      %16 = vsyncadd [#allocation3], %s15
      %s17 = sshll.u32 [#allocation2], 4
      %s18 = int_to_ptr.vmem [resolvable:$true] %s17
      %23 = dma.hbm_to_vmem [thread:$0]  %s1, 512, %s18, [#allocation3], 128, 128, 8
    $region9: #{tpu_custom_call.1} parent=1 // pred_fallthru
      _
    // Predicated region
    $region10: #{tpu_custom_call.1} parent=1 // pred_check
      _
    $region11: #{tpu_custom_call.1} parent=1 // pred_check_branch
      %25 = sbr.rel (0) target = $region13
    $region12: #{tpu_custom_call.1} parent=1 // pred_region
      _
    $region13: #{tpu_custom_call.1} parent=1 // pred_fallthru
      _
    // Predicated region
    $region14: #{tpu_custom_call.1} parent=1 // pred_check
      _
    $region15: #{tpu_custom_call.1} parent=1 // pred_check_branch
      %27 = sbr.rel (0) target = $region17
    $region16: #{tpu_custom_call.1} parent=1 // pred_region
      %28 = dma.done [#allocation3], 512
    $region17: #{tpu_custom_call.1} parent=1 // pred_fallthru
      _
    %v29 = vld [vmem:[%s0] sm:$0xff]
    %v30 = vlaneseq
    %v31 = vand.u32 %v30, 127
    %32 = vset.pattern.permute.xlu0 0
    %33 = vperm.xlu0 %32, %v29
    %v34 = vpop.permute.xlu0 %33
    %vm35 = vcmp.eq.s32.totalorder %v31, %v34
    %v36 = vsel %vm35, 1, 0
    %v37 = vcvt.s32.f32 %v36
    %38 = vset.pattern.permute.xlu0 1
    %39 = vperm.xlu0 %38, %v29
    %v40 = vpop.permute.xlu0 %39
    %vm41 = vcmp.eq.s32.totalorder %v31, %v40
    %v42 = vsel %vm41, 1, 0
    %v43 = vcvt.s32.f32 %v42
    %v44 = vadd.f32 %v37, %v43
    %45 = vset.pattern.permute.xlu0 2
    %46 = vperm.xlu0 %45, %v29
    %v47 = vpop.permute.xlu0 %46
    %vm48 = vcmp.eq.s32.totalorder %v31, %v47
    %v49 = vsel %vm48, 1, 0
    %v50 = vcvt.s32.f32 %v49
    %v51 = vadd.f32 %v44, %v50
    %52 = vset.pattern.permute.xlu0 3
    %53 = vperm.xlu0 %52, %v29
    %v54 = vpop.permute.xlu0 %53
    %vm55 = vcmp.eq.s32.totalorder %v31, %v54
    %v56 = vsel %vm55, 1, 0
    %v57 = vcvt.s32.f32 %v56
    %v58 = vadd.f32 %v51, %v57
    %v59 = vld [vmem:[#allocation2] sm:$0xff]
    %v60 = vld [vmem:[#allocation2 + $0x8] sm:$0xff]
    %v61 = vld [vmem:[#allocation2 + $0x10] sm:$0xff]
    %v62 = vld [vmem:[#allocation2 + $0x18] sm:$0xff]
    %v63 = vld [vmem:[%s2] sm:$0x1]
    %v65 = vlaneseq
    %v66 = vshrl.u32 %v65, 7
    %v67 = vsub.s32 0, %v66
    %v68 = vrot.slane %v63, %v67
    %vm70 = vcmask 261120
    %v72 = vsel %vm70, %v58, 0
    %74 = vmatprep.subr.mxu0 0.0
    %75 = vmatpush1.msra.mxu0 %v59
    %76 = vmatprep.subr.mxu0 0.0
    %77 = vmatpush1.msra.mxu0 %v60
    %78 = vmatprep.subr.mxu0 0.0
    %79 = vmatpush1.msra.mxu0 %v61
    %80 = vmatprep.subr.mxu0 0.0
    %81 = vmatpush1.msra.mxu0 %v62
    %82 = vmatprep.subr.mxu0 0.0
    %83 = vmatpush1.msra.mxu0 0.0
    %84 = vmatprep.subr.mxu0 0.0
    %85 = vmatpush1.msra.mxu0 0.0
    %86 = vmatprep.subr.mxu0 0.0
    %87 = vmatpush1.msra.mxu0 0.0
    %88 = vmatprep.subr.mxu0 0.0
    %89 = vmatpush1.msra.mxu0 0.0
    %90 = vmatprep.subr.mxu0 0.0
    %91 = vmatpush1.msra.mxu0 0.0
    %92 = vmatprep.subr.mxu0 0.0
    %93 = vmatpush1.msra.mxu0 0.0
    %94 = vmatprep.subr.mxu0 0.0
    %95 = vmatpush1.msra.mxu0 0.0
    %96 = vmatprep.subr.mxu0 0.0
    %97 = vmatpush1.msra.mxu0 0.0
    %98 = vmatprep.subr.mxu0 0.0
    %99 = vmatpush1.msra.mxu0 0.0
    %100 = vmatprep.subr.mxu0 0.0
    %101 = vmatpush1.msra.mxu0 0.0
    %102 = vmatprep.subr.mxu0 0.0
    %103 = vmatpush1.msra.mxu0 0.0
    %104 = vmatprep.subr.mxu0 0.0
    %105 = vmatpush1.msra.mxu0 0.0
    %106 = vmatprep.subr.mxu0 0.0
    %107 = vmatpush1.msra.mxu0 0.0
    %108 = vmatprep.subr.mxu0 0.0
    %109 = vmatpush1.msra.mxu0 0.0
    %110 = vmatprep.subr.mxu0 0.0
    %111 = vmatpush1.msra.mxu0 0.0
    %112 = vmatprep.subr.mxu0 0.0
    %113 = vmatpush1.msra.mxu0 0.0
    %114 = vmatprep.subr.mxu0 0.0
    %115 = vmatpush1.msra.mxu0 0.0
    %116 = vmatprep.subr.mxu0 0.0
    %117 = vmatpush1.msra.mxu0 0.0
    %118 = vmatprep.subr.mxu0 0.0
    %119 = vmatpush1.msra.mxu0 0.0
    %120 = vmatprep.subr.mxu0 0.0
    %121 = vmatpush1.msra.mxu0 0.0
    %122 = vmatprep.subr.mxu0 0.0
    %123 = vmatpush1.msra.mxu0 0.0
    %124 = vmatprep.subr.mxu0 0.0
    %125 = vmatpush1.msra.mxu0 0.0
    %126 = vmatprep.subr.mxu0 0.0
    %127 = vmatpush1.msra.mxu0 0.0
    %128 = vmatprep.subr.mxu0 0.0
    %129 = vmatpush1.msra.mxu0 0.0
    %130 = vmatprep.subr.mxu0 0.0
    %131 = vmatpush1.msra.mxu0 0.0
    %132 = vmatprep.subr.mxu0 0.0
    %133 = vmatpush1.msra.mxu0 0.0
    %134 = vmatprep.subr.mxu0 0.0
    %135 = vmatpush1.msra.mxu0 0.0
    %136 = vmatprep.subr.mxu0 0.0
    %137 = vmatpush1.msra.mxu0 0.0
    %138 = vmatprep.mubr.f32.mxu0 0.0
    %139 = vmatmul.mubr.f32.gmra.mrb[0].mxu0 %v72
    %v140 = vpop.f32.mrb[0].mxu0
    %v141 = vadd.f32 %v68, %v140
    %v142 = vpop.f32.mrb[0].mxu0
    %143 = vdwg.mxu0
    %144 = vst [vmem:[#allocation5] sm:$0xff] %v141
    // Predicated region
    $region18: #{tpu_custom_call.1} parent=1 // pred_check
      _
    $region19: #{tpu_custom_call.1} parent=1 // pred_check_branch
      %146 = sbr.rel (0) target = $region21
    $region20: #{tpu_custom_call.1} parent=1 // pred_region
      %s148 = ssub.s32 128, 128
      %149 = vsyncadd [#allocation4], %s148
      %s151 = sshll.u32 [#allocation5], 4
      %s152 = int_to_ptr.vmem [resolvable:$true] %s151
      %154 = dma.vmem_to_hbm [thread:$0]  %s152, 128, %s3, [#allocation4]
    $region21: #{tpu_custom_call.1} parent=1 // pred_fallthru
      _
    // Predicated region
    $region22: #{tpu_custom_call.1} parent=1 // pred_check
      _
    $region23: #{tpu_custom_call.1} parent=1 // pred_check_branch
      %156 = sbr.rel (0) target = $region25
    $region24: #{tpu_custom_call.1} parent=1 // pred_region
      %157 = dma.done [#allocation4], 128
    $region25: #{tpu_custom_call.1} parent=1 // pred_fallthru
      _
    %158 = vsyncpa [#allocation3], 1
    %159 = vsyncpa [#allocation4], 1

</llo_original>
